<compile_context>
chip_gen: v5e
topology: v5e:2x2
jax: 0.10.0
libtpu: 0.0.40
codegen_flags: <defaults>
</compile_context>

<pallas_src>
from typing import Tuple

import numpy as np
import jax
import jax.numpy as jnp
from jax.experimental import pallas as pl
from jax.experimental.pallas import tpu as pltpu


# ----------------------------------------------------------------------------
# Parameter setup (mirrors the PyTorch buffer init exactly; not part of forward).
# ----------------------------------------------------------------------------
def get_1d_sincos_pos_embed_from_grid(embed_dim: int, pos: np.ndarray) -> np.ndarray:
    assert embed_dim % 2 == 0
    omega = np.arange(embed_dim // 2, dtype=np.float64)
    omega /= embed_dim / 2.0
    omega = 1.0 / 10000 ** omega
    pos = pos.reshape(-1)
    out = np.einsum('m,d->md', pos, omega)
    emb_sin = np.sin(out)
    emb_cos = np.cos(out)
    return np.concatenate([emb_sin, emb_cos], axis=1)


def get_nd_sincos_pos_embed(embed_dim: int, shape: Tuple[int, ...]) -> np.ndarray:
    assert embed_dim % (2 * len(shape)) == 0
    grid = np.meshgrid(*[np.arange(s, dtype=np.float32) for s in shape])
    grid = np.stack(grid, axis=0)
    return np.concatenate(
        [get_1d_sincos_pos_embed_from_grid(embed_dim // len(shape), grid[i])
         for i in range(len(shape))],
        axis=1)


# ----------------------------------------------------------------------------
# Pallas kernel: out = x + pos  (pos broadcast over batch)
# ----------------------------------------------------------------------------
def _add_pos_kernel(x_ref, pos_ref, o_ref):
    o_ref[...] = x_ref[...] + pos_ref[...]


def _cdiv(a: int, b: int) -> int:
    return -(-a // b)


def _round_down(a: int, m: int) -> int:
    return (a // m) * m


def _round_up(a: int, m: int) -> int:
    return _cdiv(a, m) * m


def _sublane_quantum(itemsize: int) -> int:
    # f32 -> 8, bf16 -> 16, int8/fp8 -> 32 (sub-32-bit dtypes pack along sublanes).
    return max(8, 32 // itemsize)


def _default_block_bytes() -> int:
    """Per-generation tile budget (bytes per block, per ref)."""
    try:
        kind = jax.devices()[0].device_kind.lower()
    except Exception:
        return 2 << 20
    if "v7" in kind:
        return 6 << 20   # ~3.2 TB/s HBM: larger tiles amortize ~0.35us/step overhead
    if "v6" in kind:
        return 4 << 20   # 24 MiB double-buffered footprint, inside 32 MiB scoped VMEM
    return 2 << 20       # v5e & unknown: 12 MiB footprint, inside 16 MiB scoped VMEM


def _pick_tile_rows(total_rows: int, quantum: int, bytes_per_row: int,
                    max_bytes: int, want_two_tiles: bool) -> int:
    """Largest row-tile (multiple of `quantum`, <= total_rows) within the byte budget."""
    if total_rows < quantum:
        quantum = 8                      # correctness quantum; dtype packing is best-effort
    r = max(quantum, _round_down(max_bytes // bytes_per_row, quantum))
    r = min(r, _round_down(total_rows, quantum))
    if want_two_tiles and _cdiv(total_rows, r) < 2 and total_rows >= 2 * quantum:
        # batch-1, single-tile problem: split so both v7x TensorCores get work.
        r = min(r, _round_up(_cdiv(total_rows, 2), quantum))
    return r


def sinusoidal_pos_embed_forward(x: jax.Array, pos_emb: jax.Array, *,
                                 max_block_bytes: int | None = None,
                                 donate_x: bool = False) -> jax.Array:
    """x: (B, S, D); pos_emb: (1, max_tokens, D) already in x.dtype (module caches this).

    Returns x + pos_emb[:, :S].
    """
    B, S, D = x.shape
    max_tokens = pos_emb.shape[1]
    if S > max_tokens:
        raise ValueError(f"seq_len {S} exceeds positional table length {max_tokens}")
    if pos_emb.dtype != x.dtype:
        # Robustness fallback only; SinusoidalPositionalEmbeddingJAX caches a per-dtype
        # table so the hot path never pays this extra HBM pass.
        pos_emb = pos_emb.astype(x.dtype)
    if max_block_bytes is None:
        max_block_bytes = _default_block_bytes()

    itemsize = jnp.dtype(x.dtype).itemsize
    quantum = _sublane_quantum(itemsize)
    N = S * D

    # Layout selection.
    use_flat = (D % 128 != 0) and (N % 128 == 0) and ((max_tokens * D) % 128 == 0)
    if use_flat:
        # Lane-dense slabs: rows of exactly 128 lanes.  Reshapes of contiguous arrays
        # are bitcasts (no HBM traffic); the full pos table is reshaped, not sliced.
        lane = 128
        total_rows = N // 128
        xk = x.reshape(B, total_rows, lane)
        posk = pos_emb.reshape(1, (max_tokens * D) // 128, lane)
    else:
        # Natural layout: lane dim = D (dense if D % 128 == 0).
        # TODO(synk): for D % 128 != 0 with S*D % 128 != 0, stores are lane-masked;
        # a repacking pass is not worth the extra traffic for this broadcast add.
        lane = D
        total_rows = S
        xk = x
        posk = pos_emb

    bytes_per_row = lane * itemsize

    if total_rows < 8:
        # Tiny corner: blocks must equal the full dims, so pre-slice the pos table to
        # the same (sub-(8,128)) shape.  Negligible traffic at these sizes.
        posk = jax.lax.slice(posk, (0, 0, 0), (1, total_rows, lane))
        tile_rows = total_rows
        grid = (1, B)
    else:
        tile_rows = _pick_tile_rows(total_rows, quantum, bytes_per_row,
                                    max_block_bytes, want_two_tiles=(B == 1))
        grid = (_cdiv(total_rows, tile_rows), B)

    block = (1, tile_rows, lane)
    x_map = lambda r, b: (b, r, 0)
    pos_map = lambda r, b: (0, r, 0)   # constant across inner batch axis -> one fetch per tile

    block_bytes = tile_rows * bytes_per_row
    # 3 refs x 2 pipeline buffers x block + headroom; clamped to fit every generation.
    vmem_limit = min(max(6 * block_bytes + (2 << 20), 16 << 20), 64 << 20)

    out = pl.pallas_call(
        _add_pos_kernel,
        out_shape=jax.ShapeDtypeStruct(xk.shape, x.dtype),
        grid=grid,
        in_specs=[
            pl.BlockSpec(block, x_map),    # x tile
            pl.BlockSpec(block, pos_map),  # pos tile (shared across batch)
        ],
        out_specs=pl.BlockSpec(block, x_map),
        # Only alias when the caller actually donates x; otherwise XLA's defensive
        # copy would erase the benefit.
        input_output_aliases=({0: 0} if donate_x else {}),
        compiler_params=pltpu.CompilerParams(
            dimension_semantics=("parallel", "parallel"),
            vmem_limit_bytes=vmem_limit),
        cost_estimate=pl.CostEstimate(
            flops=B * N,
            transcendentals=0,
            bytes_accessed=(2 * B * N + N) * itemsize),
    )(xk, posk)

    return out.reshape(B, S, D)


class SinusoidalPositionalEmbeddingJAX:
    """JAX/Pallas port of the PyTorch module."""

    def __init__(self, embed_dim: int, shape: Tuple[int, ...], learnable: bool = False):
        if learnable:
            # TODO(synk): cannot reproduce torch's .normal_(std=0.02) RNG stream bit-for-bit;
            # deterministic jax.random init of the same distribution instead.
            max_tokens = int(np.prod(shape))
            key = jax.random.PRNGKey(42)
            self.pos_emb = (0.02 * jax.random.normal(
                key, (1, max_tokens, embed_dim))).astype(jnp.float32)
        else:
            self.pos_emb = jnp.asarray(
                get_nd_sincos_pos_embed(embed_dim, shape), dtype=jnp.float32)[None]
        # Per-dtype cache of the table so the forward path never re-casts.
        # TODO(synk): for bf16 inputs the add runs in bf16 (torch promotes to f32);
        # deliberate deviation to halve HBM traffic.
        self._pos_cache = {jnp.dtype(jnp.float32).name: self.pos_emb}

    def _pos_for(self, dtype) -> jax.Array:
        key = jnp.dtype(dtype).name
        if key not in self._pos_cache:
            self._pos_cache[key] = self.pos_emb.astype(dtype)
        return self._pos_cache[key]

    def __call__(self, x: jax.Array, *, donate_x: bool = False) -> jax.Array:
        return sinusoidal_pos_embed_forward(x, self._pos_for(x.dtype), donate_x=donate_x)


# ----------------------------------------------------------------------------
# Demo / correctness checks
# ----------------------------------------------------------------------------
if __name__ == "__main__":
    key = jax.random.PRNGKey(0)

    # ---- Case A: D not a multiple of 128, S*D is -> lane-dense flattened path.
    embed_dim = 64           # divisible by 2 * len(shape) = 4
    grid_shape = (8, 8)      # max_tokens = 64
    B, S = 2, 32             # S * embed_dim = 2048 (multiple of 128)
    module = SinusoidalPositionalEmbeddingJAX(embed_dim, grid_shape, learnable=False)

    k0, k1, k2 = jax.random.split(key, 3)
    x = jax.random.normal(k0, (B, S, embed_dim), dtype=jnp.float32)
    pos_np = np.asarray(module.pos_emb)
    ref = np.asarray(x) + pos_np[:, :S]

    out = jax.block_until_ready(module(x))
    np.testing.assert_allclose(np.asarray(out), ref, rtol=1e-6, atol=1e-6)

    # Same path, but with a tiny block budget to force a multi-tile 2-D grid
    # (row-tile outer, batch inner; pos reused across the inner batch axis).
    out_tiled = jax.block_until_ready(
        sinusoidal_pos_embed_forward(x, module._pos_for(x.dtype),
                                     max_block_bytes=8 * 128 * 4))
    np.testing.assert_allclose(np.asarray(out_tiled), ref, rtol=1e-6, atol=1e-6)

    # ---- Case B tiny-corner: S*D not a multiple of 128 and S < 8 -> full-dim block.
    S2 = 5
    x2 = jax.random.normal(k1, (B, S2, embed_dim), dtype=jnp.float32)
    ref2 = np.asarray(x2) + pos_np[:, :S2]
    out2 = jax.block_until_ready(module(x2))
    np.testing.assert_allclose(np.asarray(out2), ref2, rtol=1e-6, atol=1e-6)

    # ---- Case B lane-dense: D multiple of 128, batch=1 -> row axis split in two
    # so both v7x TensorCores get work.
    module2 = SinusoidalPositionalEmbeddingJAX(128, (4, 4), learnable=False)
    x3 = jax.random.normal(k2, (1, 16, 128), dtype=jnp.float32)
    ref3 = np.asarray(x3) + np.asarray(module2.pos_emb)[:, :16]
    out3 = jax.block_until_ready(module2(x3))
    np.testing.assert_allclose(np.asarray(out3), ref3, rtol=1e-6, atol=1e-6)

    print("KERNEL_OK")
</pallas_src>

<mosaic_0001>
module attributes {stable_mosaic.version = 11 : i64} {
  func.func @_add_pos_kernel(%arg0: i32, %arg1: i32, %arg2: memref<1x16x128xf32, #tpu.memory_space<vmem>>, %arg3: memref<1x16x128xf32, #tpu.memory_space<vmem>>, %arg4: memref<1x16x128xf32, #tpu.memory_space<vmem>>) attributes {dimension_semantics = [#tpu.dimension_semantics<parallel>, #tpu.dimension_semantics<parallel>], iteration_bounds = array<i64: 1, 2>, scalar_prefetch = 0 : i64, scratch_operands = 0 : i64, tpu.core_type = #tpu.core_type<tc>, window_params = [{transform_indices = @transform_0, window_bounds = array<i64: 1, 16, 128>}, {transform_indices = @transform_1, window_bounds = array<i64: 1, 16, 128>}, {transform_indices = @transform_2, window_bounds = array<i64: 1, 16, 128>}]} {
    %c0 = arith.constant 0 : index
    %c0_0 = arith.constant 0 : index
    %c0_1 = arith.constant 0 : index
    %0 = vector.load %arg2[%c0, %c0_0, %c0_1] : memref<1x16x128xf32, #tpu.memory_space<vmem>>, vector<1x16x128xf32>
    %c0_2 = arith.constant 0 : index
    %c0_3 = arith.constant 0 : index
    %c0_4 = arith.constant 0 : index
    %1 = vector.load %arg3[%c0_2, %c0_3, %c0_4] : memref<1x16x128xf32, #tpu.memory_space<vmem>>, vector<1x16x128xf32>
    %2 = arith.addf %0, %1 : vector<1x16x128xf32>
    %c0_5 = arith.constant 0 : index
    %c0_6 = arith.constant 0 : index
    %c0_7 = arith.constant 0 : index
    %3 = vector.load %arg4[%c0_5, %c0_6, %c0_7] : memref<1x16x128xf32, #tpu.memory_space<vmem>>, vector<1x16x128xf32>
    tpu.vector_store %arg4[%c0_5, %c0_6, %c0_7], %2 {strides = array<i32>} : memref<1x16x128xf32, #tpu.memory_space<vmem>>, vector<1x16x128xf32>,
    return
  }
  func.func @transform_0(%arg0: i32, %arg1: i32) -> (i32, i32, i32) {
    %c0_i32 = arith.constant 0 : i32
    %c0_i32_0 = arith.constant 0 : i32
    return %arg1, %arg0, %c0_i32 : i32, i32, i32
  }
  func.func @transform_1(%arg0: i32, %arg1: i32) -> (i32, i32, i32) {
    %c0_i32 = arith.constant 0 : i32
    %c0_i32_0 = arith.constant 0 : i32
    %c0_i32_1 = arith.constant 0 : i32
    return %c0_i32, %arg0, %c0_i32_0 : i32, i32, i32
  }
  func.func @transform_2(%arg0: i32, %arg1: i32) -> (i32, i32, i32) {
    %c0_i32 = arith.constant 0 : i32
    %c0_i32_0 = arith.constant 0 : i32
    return %arg1, %arg0, %c0_i32 : i32, i32, i32
  }
}

</mosaic_0001>

<llo_original>
// kernel: tpu_custom_call.1
$region0: #{tpu_custom_call.1}
  #allocation0 [shape = 'u32[]', space=smem, size = 0x4, offset = 0x4, fixed_abs, tag = 'smem constant byte address 0x4 - core index']
  #allocation1 [shape = 'u32[72,128]{1,0:T(1,128)}', space=vmem, size = 0x9000, scoped, tag = 'internal scratch']
  %s0 = inlined_call_operand.hbm [shape: f32[2,16,128], index: 0, kind: input, shape index: {}]
  %s1 = inlined_call_operand.hbm [shape: f32[1,32,128], index: 1, kind: input, shape index: {}]
  %s2 = inlined_call_operand.hbm [shape: f32[2,16,128], index: 2, kind: output, shape index: {}]
  %s3 = sld [smem:[#allocation0]]
  $region49: #{tpu_custom_call.1} parent=0
    _
  %s5 = ssub.s32 1, %s3
  %s6 = scalar_select 0, %s5, %s3
  $region1: #{tpu_custom_call.1} parent=0
    #allocation2 [shape = 'u8[16384]{0}', space=vmem, size = 0x4000, scoped, tag = 'input window, operand 0']
    #allocation3 [shape = 's32[2]{0}', space=sflag, size = 0x8, scoped, tag = 'scoped memory for tpu_custom_call.1']
    #allocation4 [shape = 's32[2]{0}', space=sflag, size = 0x8, scoped, tag = 'scoped memory for tpu_custom_call.1']
    #allocation5 [shape = 'u8[8192]{0}', space=vmem, size = 0x2000, scoped, tag = 'input window, operand 1, single buffered']
    #allocation6 [shape = 's32[1]{0}', space=sflag, size = 0x4, scoped, tag = 'scoped memory for tpu_custom_call.1']
    #allocation7 [shape = 'u8[16384]{0}', space=vmem, size = 0x4000, scoped, tag = 'output window, operand 0']
    %7 = vsyncpa [#allocation3], 0
    %s8 = scalar_lea.sflag [#allocation3], 1
    %9 = vsyncpa %s8, 0
    %10 = vsyncpa [#allocation6], 0
    %11 = vsyncpa [#allocation4], 0
    %s12 = scalar_lea.sflag [#allocation4], 1
    %13 = vsyncpa %s12, 0
    loop: start=0, step=1, limit=4
    $region2: #{tpu_custom_call.1} parent=1 // loop_pre_header
      _
    $region3: #{tpu_custom_call.1} parent=1 // loop_header
      %s15 = sphi 0, %s19
      %p16 = scmp.ge.s32.totalorder %s15, 4
      %s22 = sphi 0, %s34
      %s23 = sphi 0, %s30
      %s24 = sphi 0, %s22
      %s25 = sphi 0, %s23
      %s26 = sphi 0, %s24
      %s27 = sphi 0, %s25
      %s39 = sphi 0, %s41
      %s42 = sphi 0, %s39
      %s43 = sphi 0, %s42
      %s59 = sphi 0, %s43
      %s65 = sphi 0, %s67
      %s68 = sphi 0, %s65
      %s69 = sphi 0, %s68
      %s85 = sphi 0, %s69
      %s93 = sphi 0, %s95
      %s96 = sphi 0, %s93
      %s97 = sphi 0, %s96
      %s113 = sphi 0, %s97
    $region4: #{tpu_custom_call.1} parent=1 // loop_header_branch
      %18 = sbr.rel (%p16) target = $region8
    $region5: #{tpu_custom_call.1} parent=1 // loop_body
      %s20 = ssub.s32 %s15, 1
      %s21 = ssub.s32 %s15, 2
      %s28 = sadd.s32 1, %s23
      %p29 = scmp.ge.s32.totalorder %s28, 2
      %s30 = scalar_select %p29, 0, %s28
      %s31 = sadd.s32 1, %s22
      %s32 = scalar_select %p29, %s31, %s22
      %p33 = scmp.ge.s32.totalorder %s32, 1
      %s34 = scalar_select %p33, 0, %s32
      %s35 = ssub.s32 %s23, %s30
      %s36 = ssub.s32 %s22, %s34
      %s37 = sor.u32 %s35, %s36
      %p38 = scmp.eq.s32.totalorder %s37, 0
      %s40 = sadd.s32 %s39, 1
      %s41 = scalar_select %p38, %s39, %s40
      %p44 = pneg %p38
      %p45 = scmp.eq.s32.totalorder %s15, 1
      %p46 = por %p44, %p45
      %p47 = scmp.ne.s32.totalorder %s39, %s42
      %p48 = scmp.eq.s32.totalorder %s15, 0
      %p49 = por %p47, %p48
      %p50 = scmp.ne.s32.totalorder %s39, %s42
      %p51 = scmp.eq.s32.totalorder %s20, 1
      %p52 = por %p50, %p51
      %p53 = scmp.ne.s32.totalorder %s42, %s43
      %p54 = scmp.eq.s32.totalorder %s20, 0
      %p55 = por %p53, %p54
      %p56 = scmp.ne.s32.totalorder %s42, %s43
      %p57 = scmp.eq.s32.totalorder %s21, 1
      %p58 = por %p56, %p57
      %p60 = scmp.ne.s32.totalorder %s43, %s59
      %p61 = scmp.eq.s32.totalorder %s21, 0
      %p62 = por %p60, %p61
      %s63 = ssub.s32 %s22, %s34
      %p64 = scmp.eq.s32.totalorder %s63, 0
      %s66 = sadd.s32 %s65, 1
      %s67 = scalar_select %p64, %s65, %s66
      %p70 = pneg %p64
      %p71 = scmp.eq.s32.totalorder %s15, 1
      %p72 = por %p70, %p71
      %p73 = scmp.ne.s32.totalorder %s65, %s68
      %p74 = scmp.eq.s32.totalorder %s15, 0
      %p75 = por %p73, %p74
      %p76 = scmp.ne.s32.totalorder %s65, %s68
      %p77 = scmp.eq.s32.totalorder %s20, 1
      %p78 = por %p76, %p77
      %p79 = scmp.ne.s32.totalorder %s68, %s69
      %p80 = scmp.eq.s32.totalorder %s20, 0
      %p81 = por %p79, %p80
      %p82 = scmp.ne.s32.totalorder %s68, %s69
      %p83 = scmp.eq.s32.totalorder %s21, 1
      %p84 = por %p82, %p83
      %p86 = scmp.ne.s32.totalorder %s69, %s85
      %p87 = scmp.eq.s32.totalorder %s21, 0
      %p88 = por %p86, %p87
      %s89 = ssub.s32 %s23, %s30
      %s90 = ssub.s32 %s22, %s34
      %s91 = sor.u32 %s89, %s90
      %p92 = scmp.eq.s32.totalorder %s91, 0
      %s94 = sadd.s32 %s93, 1
      %s95 = scalar_select %p92, %s93, %s94
      %p98 = pneg %p92
      %p99 = scmp.eq.s32.totalorder %s15, 1
      %p100 = por %p98, %p99
      %p101 = scmp.ne.s32.totalorder %s93, %s96
      %p102 = scmp.eq.s32.totalorder %s15, 0
      %p103 = por %p101, %p102
      %p104 = scmp.ne.s32.totalorder %s93, %s96
      %p105 = scmp.eq.s32.totalorder %s20, 1
      %p106 = por %p104, %p105
      %p107 = scmp.ne.s32.totalorder %s96, %s97
      %p108 = scmp.eq.s32.totalorder %s20, 0
      %p109 = por %p107, %p108
      %p110 = scmp.ne.s32.totalorder %s96, %s97
      %p111 = scmp.eq.s32.totalorder %s21, 1
      %p112 = por %p110, %p111
      %p114 = scmp.ne.s32.totalorder %s97, %s113
      %p115 = scmp.eq.s32.totalorder %s21, 0
      %p116 = por %p114, %p115
      %p117 = scmp.le.s32.totalorder 1, %s15
      %p118 = scmp.lt.s32.totalorder %s15, 3
      %p119 = pnand %p117, %p118
      %p120 = pneg %p119
      // Predicated region
      $region9: #{tpu_custom_call.1} parent=5 // pred_check
        _
      $region10: #{tpu_custom_call.1} parent=5 // pred_check_branch
        %122 = sbr.rel (%p119) target = $region12
      $region11: #{tpu_custom_call.1} parent=5 // pred_region
        %s123 = ssub.s32 %s15, 1
        // Predicated region
        $region13: #{tpu_custom_call.1} parent=11 // pred_check
          %p124 = pneg %p81
        $region14: #{tpu_custom_call.1} parent=11 // pred_check_branch
          %126 = sbr.rel (%p124) target = $region16
        $region15: #{tpu_custom_call.1} parent=11 // pred_region
          %s127 = smul.u32 2, %s24
          %129 = vsyncadd [#allocation6], 0
          %s130 = smul.addr %s127, 8
          %s131 = scalar_lea.hbm %s1, %s130
          %s132 = sshll.u32 %s131, 4
          %s133 = int_to_ptr.hbm [resolvable:$true] %s132
          %s134 = sshll.u32 [#allocation5], 4
          %s135 = int_to_ptr.vmem [resolvable:$true] %s134
          %140 = dma.hbm_to_vmem [thread:$0]  %s133, 256, %s135, [#allocation6], 128, 128, 8
        $region16: #{tpu_custom_call.1} parent=11 // pred_fallthru
          _
      $region12: #{tpu_custom_call.1} parent=5 // pred_fallthru
        _
      %p141 = scmp.lt.s32.totalorder %s15, 2
      // Predicated region
      $region17: #{tpu_custom_call.1} parent=5 // pred_check
        %p142 = pneg %p141
      $region18: #{tpu_custom_call.1} parent=5 // pred_check_branch
        %144 = sbr.rel (%p142) target = $region20
      $region19: #{tpu_custom_call.1} parent=5 // pred_region
        // Predicated region
        $region21: #{tpu_custom_call.1} parent=19 // pred_check
          %p145 = pneg %p49
        $region22: #{tpu_custom_call.1} parent=19 // pred_check_branch
          %147 = sbr.rel (%p145) target = $region24
        $region23: #{tpu_custom_call.1} parent=19 // pred_region
          %s148 = sand.u32 %s39, 1
          %s149 = scalar_lea.sflag [#allocation3], %s148
          %s150 = sand.u32 %s39, 1
          %s151 = smul.addr %s150, 16
          %s152 = scalar_lea.vmem [#allocation2], %s151
          %s153 = smul.u32 2, %s22
          %155 = vsyncadd %s149, 0
          %s156 = smul.addr %s23, 2
          %s157 = sadd.s32 %s153, %s156
          %s158 = smul.addr %s157, 8
          %s159 = scalar_lea.hbm %s0, %s158
          %s160 = sshll.u32 %s159, 4
          %s161 = int_to_ptr.hbm [resolvable:$true] %s160
          %s162 = sshll.u32 %s152, 4
          %s163 = int_to_ptr.vmem [resolvable:$true] %s162
          %168 = dma.hbm_to_vmem [thread:$0]  %s161, 256, %s163, %s149, 128, 128, 8
        $region24: #{tpu_custom_call.1} parent=19 // pred_fallthru
          _
      $region20: #{tpu_custom_call.1} parent=5 // pred_fallthru
        _
      %p169 = scmp.le.s32.totalorder 1, %s15
      %p170 = scmp.lt.s32.totalorder %s15, 3
      %p171 = pnand %p169, %p170
      %p172 = pneg %p171
      // Predicated region
      $region25: #{tpu_custom_call.1} parent=5 // pred_check
        _
      $region26: #{tpu_custom_call.1} parent=5 // pred_check_branch
        %174 = sbr.rel (%p171) target = $region28
      $region27: #{tpu_custom_call.1} parent=5 // pred_region
        %s175 = ssub.s32 %s15, 1
        %s176 = sand.u32 %s42, 1
        %s177 = scalar_lea.sflag [#allocation3], %s176
        %s178 = sand.u32 %s42, 1
        %s179 = smul.addr %s178, 16
        %s180 = scalar_lea.vmem [#allocation2], %s179
        // Predicated region
        $region29: #{tpu_custom_call.1} parent=27 // pred_check
          %p181 = pneg %p55
        $region30: #{tpu_custom_call.1} parent=27 // pred_check_branch
          %183 = sbr.rel (%p181) target = $region32
        $region31: #{tpu_custom_call.1} parent=27 // pred_region
          %185 = dma.done %s177, 256
        $region32: #{tpu_custom_call.1} parent=27 // pred_fallthru
          _
        // Predicated region
        $region33: #{tpu_custom_call.1} parent=27 // pred_check
          %p186 = pneg %p81
        $region34: #{tpu_custom_call.1} parent=27 // pred_check_branch
          %188 = sbr.rel (%p186) target = $region36
        $region35: #{tpu_custom_call.1} parent=27 // pred_region
          %190 = dma.done [#allocation6], 256
        $region36: #{tpu_custom_call.1} parent=27 // pred_fallthru
          _
        %s191 = sand.u32 %s42, 1
        %s192 = scalar_lea.sflag [#allocation3], %s191
        %s193 = sand.u32 %s42, 1
        %s194 = smul.addr %s193, 16
        %s195 = scalar_lea.vmem [#allocation2], %s194
        %p196 = pneg %p55
        %p197 = pneg %p52
        %p198 = pneg %p81
        %p199 = pneg %p78
        %p200 = pneg %p109
        %p201 = pneg %p106
        %s202 = sand.u32 %s96, 1
        %s203 = scalar_lea.sflag [#allocation4], %s202
        %s204 = sand.u32 %s96, 1
        %s205 = smul.addr %s204, 16
        %s206 = scalar_lea.vmem [#allocation7], %s205
        %s207 = smul.u32 2, %s24
        %s208 = smul.u32 2, %s24
        %s209 = smul.u32 2, %s24
        %v210 = vld [vmem:[%s180] sm:$0xff]
        %v211 = vld [vmem:[%s180 + $0x8] sm:$0xff]
        %v212 = vld [vmem:[#allocation5] sm:$0xff]
        %v213 = vld [vmem:[#allocation5 + $0x8] sm:$0xff]
        %v214 = vadd.f32 %v210, %v212
        %v215 = vadd.f32 %v211, %v213
        %216 = vst [vmem:[%s206] sm:$0xff] %v214
        %217 = vst [vmem:[%s206 + $0x8] sm:$0xff] %v215
        %s218 = sand.u32 %s96, 1
        %s219 = scalar_lea.sflag [#allocation4], %s218
        %s220 = sand.u32 %s96, 1
        %s221 = smul.addr %s220, 16
        %s222 = scalar_lea.vmem [#allocation7], %s221
        // Predicated region
        $region37: #{tpu_custom_call.1} parent=27 // pred_check
          %p223 = pneg %p106
        $region38: #{tpu_custom_call.1} parent=27 // pred_check_branch
          %225 = sbr.rel (%p223) target = $region40
        $region39: #{tpu_custom_call.1} parent=27 // pred_region
          %s226 = smul.u32 2, %s24
          %228 = vsyncadd %s219, 0
          %s229 = smul.addr %s25, 2
          %s230 = sadd.s32 %s226, %s229
          %s231 = smul.addr %s230, 8
          %s232 = scalar_lea.hbm %s2, %s231
          %s233 = sshll.u32 %s222, 4
          %s234 = int_to_ptr.vmem [resolvable:$true] %s233
          %s235 = sshll.u32 %s232, 4
          %s236 = int_to_ptr.hbm [resolvable:$true] %s235
          %241 = dma.vmem_to_hbm [thread:$0]  %s234, 256, %s236, %s219, 128, 128, 8
        $region40: #{tpu_custom_call.1} parent=27 // pred_fallthru
          _
      $region28: #{tpu_custom_call.1} parent=5 // pred_fallthru
        _
      %p242 = scmp.le.s32.totalorder 2, %s15
      // Predicated region
      $region41: #{tpu_custom_call.1} parent=5 // pred_check
        %p243 = pneg %p242
      $region42: #{tpu_custom_call.1} parent=5 // pred_check_branch
        %245 = sbr.rel (%p243) target = $region44
      $region43: #{tpu_custom_call.1} parent=5 // pred_region
        %s246 = ssub.s32 %s15, 2
        // Predicated region
        $region45: #{tpu_custom_call.1} parent=43 // pred_check
          %p247 = pneg %p112
        $region46: #{tpu_custom_call.1} parent=43 // pred_check_branch
          %249 = sbr.rel (%p247) target = $region48
        $region47: #{tpu_custom_call.1} parent=43 // pred_region
          %s250 = sand.u32 %s97, 1
          %s251 = scalar_lea.sflag [#allocation4], %s250
          %s252 = sand.u32 %s97, 1
          %s253 = smul.addr %s252, 16
          %s254 = scalar_lea.vmem [#allocation7], %s253
          %256 = dma.done %s251, 256
        $region48: #{tpu_custom_call.1} parent=43 // pred_fallthru
          _
      $region44: #{tpu_custom_call.1} parent=5 // pred_fallthru
        _
    $region6: #{tpu_custom_call.1} parent=1 // loop_footer
      %s19 = sadd.s32 1, %s15
    $region7: #{tpu_custom_call.1} parent=1 // loop_footer_branch
      %14 = sbr.rel target = $region3
    $region8: #{tpu_custom_call.1} parent=1 // loop_exit
      _
    %257 = vsyncpa [#allocation3], 1
    %s258 = scalar_lea.sflag [#allocation3], 1
    %259 = vsyncpa %s258, 1
    %260 = vsyncpa [#allocation6], 1
    %261 = vsyncpa [#allocation4], 1
    %s262 = scalar_lea.sflag [#allocation4], 1
    %263 = vsyncpa %s262, 1

</llo_original>
